<compile_context>
chip_gen: v7x
topology: tpu7x:2x2x1
jax: 0.10.0
libtpu: 0.0.40
codegen_flags: <defaults>
</compile_context>

<pallas_src>
import functools

import jax
import jax.numpy as jnp
from jax.experimental import pallas as pl
from jax.experimental.pallas import tpu as pltpu


def _dice_kernel(p_ref, t_ref, loss_ref, num_acc, den_acc, *,
                 smooth, p_exp, d_total, tile_d, needs_mask):
    k = pl.program_id(1)

    @pl.when(k == 0)
    def _():
        num_acc[...] = jnp.zeros_like(num_acc)
        den_acc[...] = jnp.zeros_like(den_acc)

    # Native-dtype tile -> f32 accumulation inside the kernel.
    pred = p_ref[...].astype(jnp.float32)
    targ = t_ref[...].astype(jnp.float32)

    if needs_mask:
        # Zero out the overhang of the (ragged) last feature tile.
        col = k * tile_d + jax.lax.broadcasted_iota(jnp.int32, pred.shape, 1)
        valid = col < d_total
        pred = jnp.where(valid, pred, 0.0)
        targ = jnp.where(valid, targ, 0.0)

    if p_exp == 2:
        den_tile = pred * pred + targ * targ
    elif isinstance(p_exp, int):
        den_tile = jax.lax.integer_pow(pred, p_exp) + jax.lax.integer_pow(targ, p_exp)
    else:
        den_tile = pred ** p_exp + targ ** p_exp

    # Per-row partial sums over this feature tile.
    num_acc[...] += jnp.sum(pred * targ, axis=1, keepdims=True)
    den_acc[...] += jnp.sum(den_tile, axis=1, keepdims=True)

    @pl.when(k == pl.num_programs(1) - 1)
    def _():
        num = num_acc[...] + smooth
        den = den_acc[...] + smooth
        loss_ref[...] = 1.0 - num / den


def binary_dice_loss(predict, target, *, smooth=1.0, p=2, reduction="mean",
                     tile_d=8192):
    assert predict.shape[0] == target.shape[0], \
        "predict & target batch size don't match"
    n = predict.shape[0]

    # Flatten [N, *] -> [N, D] in native dtype (metadata-only for contiguous).
    pred2d = predict.reshape(n, -1)
    targ2d = target.reshape(n, -1)
    d = pred2d.shape[1]

    # Batch block: fill 8 sublanes per vreg when possible, else one full block.
    if n >= 8 and n % 8 == 0:
        bn = 8
    else:
        bn = n

    # Feature tile sizing against a conservative VMEM budget:
    # 2 inputs x 2 pipeline buffers x bn x tile_d x elem_size <= ~8 MiB.
    esize = max(jnp.dtype(pred2d.dtype).itemsize,
                jnp.dtype(targ2d.dtype).itemsize)
    budget = 8 * 1024 * 1024
    max_tile = max(128, (budget // (4 * bn * esize)) // 128 * 128)
    tile_d = max(128, (min(int(tile_d), max_tile) // 128) * 128)

    n_feat = pl.cdiv(d, tile_d)
    if n_feat == 1:
        tile_d = d            # single full-extent block, no masking needed
    needs_mask = (d % tile_d) != 0

    grid = (n // bn, n_feat)

    kernel = functools.partial(
        _dice_kernel,
        smooth=float(smooth), p_exp=p,
        d_total=d, tile_d=tile_d, needs_mask=needs_mask)

    loss_per_row = pl.pallas_call(
        kernel,
        out_shape=jax.ShapeDtypeStruct((n, 1), jnp.float32),
        grid_spec=pltpu.PrefetchScalarGridSpec(
            num_scalar_prefetch=0,
            grid=grid,
            in_specs=[
                pl.BlockSpec((bn, tile_d), lambda i, k: (i, k)),
                pl.BlockSpec((bn, tile_d), lambda i, k: (i, k)),
            ],
            out_specs=pl.BlockSpec((bn, 1), lambda i, k: (i, 0)),
            scratch_shapes=[
                pltpu.VMEM((bn, 1), jnp.float32),
                pltpu.VMEM((bn, 1), jnp.float32),
            ],
        ),
        compiler_params=pltpu.CompilerParams(
            dimension_semantics=("parallel", "arbitrary"),
            vmem_limit_bytes=32 * 1024 * 1024,
        ),
    )(pred2d, targ2d)

    loss = loss_per_row[:, 0]  # shape [N,]

    if reduction == "mean":
        return jnp.mean(loss)
    elif reduction == "sum":
        return jnp.sum(loss)
    elif reduction == "none":
        return loss
    else:
        raise Exception("Unexpected reduction {}".format(reduction))


def _reference(predict, target, smooth=1.0, p=2, reduction="mean"):
    n = predict.shape[0]
    pr = predict.reshape(n, -1).astype(jnp.float32)
    tg = target.reshape(n, -1).astype(jnp.float32)
    num = jnp.sum(pr * tg, axis=1) + smooth
    den = jnp.sum(pr ** p + tg ** p, axis=1) + smooth
    loss = 1.0 - num / den
    if reduction == "mean":
        return jnp.mean(loss)
    if reduction == "sum":
        return jnp.sum(loss)
    return loss


if __name__ == "__main__":
    key = jax.random.PRNGKey(0)
    k1, k2 = jax.random.split(key)

    # predict: [N, C, H, W] probabilities; target: binary mask of same shape
    predict = jax.nn.sigmoid(jax.random.normal(k1, (2, 4, 16, 16), jnp.float32))
    target = (jax.random.uniform(k2, (2, 4, 16, 16)) > 0.5).astype(jnp.float32)

    out = binary_dice_loss(predict, target, smooth=1.0, p=2, reduction="mean")
    out = jax.block_until_ready(out)

    ref = _reference(predict, target, smooth=1.0, p=2, reduction="mean")
    assert jnp.allclose(out, ref, atol=1e-5, rtol=1e-5), (out, ref)

    # Also sanity-check a ragged-D case exercising the in-kernel tail mask.
    p2 = jax.nn.sigmoid(jax.random.normal(k1, (2, 3, 17, 19), jnp.float32))
    t2 = (jax.random.uniform(k2, (2, 3, 17, 19)) > 0.5).astype(jnp.float32)
    out2 = jax.block_until_ready(
        binary_dice_loss(p2, t2, smooth=1.0, p=2, reduction="none", tile_d=512))
    ref2 = _reference(p2, t2, smooth=1.0, p=2, reduction="none")
    assert jnp.allclose(out2, ref2, atol=1e-5, rtol=1e-5), (out2, ref2)

    print("KERNEL_OK")
</pallas_src>

<mosaic_0001>
module attributes {stable_mosaic.version = 11 : i64} {
  func.func @_dice_kernel(%arg0: i32, %arg1: i32, %arg2: memref<2x1024xf32, #tpu.memory_space<vmem>>, %arg3: memref<2x1024xf32, #tpu.memory_space<vmem>>, %arg4: memref<2x1xf32, #tpu.memory_space<vmem>>, %arg5: memref<2x1xf32, #tpu.memory_space<vmem>>, %arg6: memref<2x1xf32, #tpu.memory_space<vmem>>) attributes {dimension_semantics = [#tpu.dimension_semantics<parallel>, #tpu.dimension_semantics<arbitrary>], iteration_bounds = array<i64: 1, 1>, scalar_prefetch = 0 : i64, scratch_operands = 2 : i64, tpu.core_type = #tpu.core_type<tc>, window_params = [{transform_indices = @transform_0, window_bounds = array<i64: 2, 1024>}, {transform_indices = @transform_1, window_bounds = array<i64: 2, 1024>}, {transform_indices = @transform_2, window_bounds = array<i64: 2, 1>}]} {
    %c0_i32 = arith.constant 0 : i32
    %0 = arith.cmpi eq, %arg1, %c0_i32 : i32
    %1 = arith.extui %0 : i1 to i32
    %c0_i32_0 = arith.constant 0 : i32
    %2 = arith.cmpi ne, %1, %c0_i32_0 : i32
    scf.if %2 {
      %cst_15 = arith.constant 0.000000e+00 : f32
      %22 = vector.broadcast %cst_15 : f32 to vector<2x1xf32>
      %c0_16 = arith.constant 0 : index
      %c0_17 = arith.constant 0 : index
      %23 = vector.load %arg5[%c0_16, %c0_17] : memref<2x1xf32, #tpu.memory_space<vmem>>, vector<2x1xf32>
      tpu.vector_store %arg5[%c0_16, %c0_17], %22 {strides = array<i32>} : memref<2x1xf32, #tpu.memory_space<vmem>>, vector<2x1xf32>,
      %cst_18 = arith.constant 0.000000e+00 : f32
      %24 = vector.broadcast %cst_18 : f32 to vector<2x1xf32>
      %c0_19 = arith.constant 0 : index
      %c0_20 = arith.constant 0 : index
      %25 = vector.load %arg6[%c0_19, %c0_20] : memref<2x1xf32, #tpu.memory_space<vmem>>, vector<2x1xf32>
      tpu.vector_store %arg6[%c0_19, %c0_20], %24 {strides = array<i32>} : memref<2x1xf32, #tpu.memory_space<vmem>>, vector<2x1xf32>,
    } else {
    }
    %c0 = arith.constant 0 : index
    %c0_1 = arith.constant 0 : index
    %3 = vector.load %arg2[%c0, %c0_1] : memref<2x1024xf32, #tpu.memory_space<vmem>>, vector<2x1024xf32>
    %c0_2 = arith.constant 0 : index
    %c0_3 = arith.constant 0 : index
    %4 = vector.load %arg3[%c0_2, %c0_3] : memref<2x1024xf32, #tpu.memory_space<vmem>>, vector<2x1024xf32>
    %5 = arith.mulf %3, %3 : vector<2x1024xf32>
    %6 = arith.mulf %4, %4 : vector<2x1024xf32>
    %7 = arith.addf %5, %6 : vector<2x1024xf32>
    %c0_4 = arith.constant 0 : index
    %c0_5 = arith.constant 0 : index
    %8 = vector.load %arg5[%c0_4, %c0_5] : memref<2x1xf32, #tpu.memory_space<vmem>>, vector<2x1xf32>
    %9 = arith.mulf %3, %4 : vector<2x1024xf32>
    %cst = arith.constant dense<0.000000e+00> : vector<2xf32>
    %10 = vector.multi_reduction <add>, %9, %cst [1] : vector<2x1024xf32> to vector<2xf32>
    %11 = vector.shape_cast %10 : vector<2xf32> to vector<2x1xf32>
    %12 = arith.addf %8, %11 : vector<2x1xf32>
    %c0_6 = arith.constant 0 : index
    %c0_7 = arith.constant 0 : index
    %13 = vector.load %arg5[%c0_6, %c0_7] : memref<2x1xf32, #tpu.memory_space<vmem>>, vector<2x1xf32>
    tpu.vector_store %arg5[%c0_6, %c0_7], %12 {strides = array<i32>} : memref<2x1xf32, #tpu.memory_space<vmem>>, vector<2x1xf32>,
    %c0_8 = arith.constant 0 : index
    %c0_9 = arith.constant 0 : index
    %14 = vector.load %arg6[%c0_8, %c0_9] : memref<2x1xf32, #tpu.memory_space<vmem>>, vector<2x1xf32>
    %cst_10 = arith.constant dense<0.000000e+00> : vector<2xf32>
    %15 = vector.multi_reduction <add>, %7, %cst_10 [1] : vector<2x1024xf32> to vector<2xf32>
    %16 = vector.shape_cast %15 : vector<2xf32> to vector<2x1xf32>
    %17 = arith.addf %14, %16 : vector<2x1xf32>
    %c0_11 = arith.constant 0 : index
    %c0_12 = arith.constant 0 : index
    %18 = vector.load %arg6[%c0_11, %c0_12] : memref<2x1xf32, #tpu.memory_space<vmem>>, vector<2x1xf32>
    tpu.vector_store %arg6[%c0_11, %c0_12], %17 {strides = array<i32>} : memref<2x1xf32, #tpu.memory_space<vmem>>, vector<2x1xf32>,
    %c0_i32_13 = arith.constant 0 : i32
    %19 = arith.cmpi eq, %arg1, %c0_i32_13 : i32
    %20 = arith.extui %19 : i1 to i32
    %c0_i32_14 = arith.constant 0 : i32
    %21 = arith.cmpi ne, %20, %c0_i32_14 : i32
    scf.if %21 {
      %c0_15 = arith.constant 0 : index
      %c0_16 = arith.constant 0 : index
      %22 = vector.load %arg5[%c0_15, %c0_16] : memref<2x1xf32, #tpu.memory_space<vmem>>, vector<2x1xf32>
      %cst_17 = arith.constant 1.000000e+00 : f32
      %23 = vector.broadcast %cst_17 : f32 to vector<2x1xf32>
      %24 = arith.addf %22, %23 : vector<2x1xf32>
      %c0_18 = arith.constant 0 : index
      %c0_19 = arith.constant 0 : index
      %25 = vector.load %arg6[%c0_18, %c0_19] : memref<2x1xf32, #tpu.memory_space<vmem>>, vector<2x1xf32>
      %cst_20 = arith.constant 1.000000e+00 : f32
      %26 = vector.broadcast %cst_20 : f32 to vector<2x1xf32>
      %27 = arith.addf %25, %26 : vector<2x1xf32>
      %28 = arith.divf %24, %27 : vector<2x1xf32>
      %cst_21 = arith.constant 1.000000e+00 : f32
      %29 = vector.broadcast %cst_21 : f32 to vector<2x1xf32>
      %30 = arith.subf %29, %28 : vector<2x1xf32>
      %c0_22 = arith.constant 0 : index
      %c0_23 = arith.constant 0 : index
      %31 = vector.load %arg4[%c0_22, %c0_23] : memref<2x1xf32, #tpu.memory_space<vmem>>, vector<2x1xf32>
      tpu.vector_store %arg4[%c0_22, %c0_23], %30 {strides = array<i32>} : memref<2x1xf32, #tpu.memory_space<vmem>>, vector<2x1xf32>,
    } else {
    }
    return
  }
  func.func @transform_0(%arg0: i32, %arg1: i32) -> (i32, i32) {
    %c0_i32 = arith.constant 0 : i32
    return %arg0, %arg1 : i32, i32
  }
  func.func @transform_1(%arg0: i32, %arg1: i32) -> (i32, i32) {
    %c0_i32 = arith.constant 0 : i32
    return %arg0, %arg1 : i32, i32
  }
  func.func @transform_2(%arg0: i32, %arg1: i32) -> (i32, i32) {
    %c0_i32 = arith.constant 0 : i32
    %c0_i32_0 = arith.constant 0 : i32
    return %arg0, %c0_i32 : i32, i32
  }
}

</mosaic_0001>

<llo_original>
// kernel: tpu_custom_call.1
$region0: #{tpu_custom_call.1}
  #allocation0 [shape = 'u32[]', space=smem, size = 0x4, offset = 0x4, fixed_abs, tag = 'smem constant byte address 0x4 - core index']
  #allocation1 [shape = 'u32[144,128]{1,0:T(1,128)}', space=vmem, size = 0x12000, scoped, tag = 'internal scratch']
  #allocation2 [shape = 'f32[2,1]{1,0:T(2,128)}', space=vmem, size = 0x400, scoped, tag = 'scratch operand']
  #allocation3 [shape = 'f32[2,1]{1,0:T(2,128)}', space=vmem, size = 0x400, scoped, tag = 'scratch operand']
  %s0 = inlined_call_operand.hbm [shape: f32[2,1024], index: 0, kind: input, shape index: {}]
  %s1 = inlined_call_operand.hbm [shape: f32[2,1024], index: 1, kind: input, shape index: {}]
  %s2 = inlined_call_operand.vmem [shape: f32[2,1], index: 2, kind: output, shape index: {}]
  %s3 = sld [smem:[#allocation0]]
  $region34: #{tpu_custom_call.1} parent=0
    _
  %s5 = ssub.s32 1, %s3
  %s6 = scalar_select 0, %s5, %s3
  $region1: #{tpu_custom_call.1} parent=0
    #allocation4 [shape = 'u8[8192]{0}', space=vmem, size = 0x2000, scoped, tag = 'input window, operand 0, single buffered']
    #allocation5 [shape = 's32[1]{0}', space=sflag, size = 0x4, scoped, tag = 'scoped memory for tpu_custom_call.1']
    #allocation6 [shape = 'u8[8192]{0}', space=vmem, size = 0x2000, scoped, tag = 'input window, operand 1, single buffered']
    #allocation7 [shape = 's32[1]{0}', space=sflag, size = 0x4, scoped, tag = 'scoped memory for tpu_custom_call.1']
    %7 = vsyncpa [#allocation5], 0
    %8 = vsyncpa [#allocation7], 0
    // Predicated region
    $region2: #{tpu_custom_call.1} parent=1 // pred_check
      _
    $region3: #{tpu_custom_call.1} parent=1 // pred_check_branch
      %10 = sbr.rel (0) target = $region5
    $region4: #{tpu_custom_call.1} parent=1 // pred_region
      %s12 = ssub.s32 256, 256
      %13 = vsyncadd [#allocation5], %s12
      %s15 = sshll.u32 [#allocation4], 4
      %s16 = int_to_ptr.vmem [resolvable:$true] %s15
      %18 = dma.hbm_to_vmem [thread:$0]  %s0, 256, %s16, [#allocation5]
    $region5: #{tpu_custom_call.1} parent=1 // pred_fallthru
      _
    // Predicated region
    $region6: #{tpu_custom_call.1} parent=1 // pred_check
      _
    $region7: #{tpu_custom_call.1} parent=1 // pred_check_branch
      %20 = sbr.rel (0) target = $region9
    $region8: #{tpu_custom_call.1} parent=1 // pred_region
      %s22 = ssub.s32 256, 256
      %23 = vsyncadd [#allocation7], %s22
      %s25 = sshll.u32 [#allocation6], 4
      %s26 = int_to_ptr.vmem [resolvable:$true] %s25
      %28 = dma.hbm_to_vmem [thread:$0]  %s1, 256, %s26, [#allocation7]
    $region9: #{tpu_custom_call.1} parent=1 // pred_fallthru
      _
    // Predicated region
    $region10: #{tpu_custom_call.1} parent=1 // pred_check
      _
    $region11: #{tpu_custom_call.1} parent=1 // pred_check_branch
      %30 = sbr.rel (0) target = $region13
    $region12: #{tpu_custom_call.1} parent=1 // pred_region
      %31 = dma.done [#allocation5], 256
    $region13: #{tpu_custom_call.1} parent=1 // pred_fallthru
      _
    // Predicated region
    $region14: #{tpu_custom_call.1} parent=1 // pred_check
      _
    $region15: #{tpu_custom_call.1} parent=1 // pred_check_branch
      %33 = sbr.rel (0) target = $region17
    $region16: #{tpu_custom_call.1} parent=1 // pred_region
      %34 = dma.done [#allocation7], 256
    $region17: #{tpu_custom_call.1} parent=1 // pred_fallthru
      _
    %p35 = scmp.eq.s32.totalorder 0, 0
    // Predicated region
    $region18: #{tpu_custom_call.1} parent=1 // pred_check
      %p36 = pneg %p35
    $region19: #{tpu_custom_call.1} parent=1 // pred_check_branch
      %38 = sbr.rel (%p36) target = $region21
    $region20: #{tpu_custom_call.1} parent=1 // pred_region
      %vm39 = vcmask 1024
      %40 = vst.msk [vmem:[#allocation2] sm:$0x3] %vm39, 0.0
      %41 = vst.msk [vmem:[#allocation3] sm:$0x3] %vm39, 0.0
    $region21: #{tpu_custom_call.1} parent=1 // pred_fallthru
      _
    %v42 = vld [vmem:[#allocation4] sm:$0xff]
    %v43 = vld [vmem:[#allocation4 + $0x8] sm:$0xff]
    %v44 = vld [vmem:[#allocation6] sm:$0xff]
    %v45 = vld [vmem:[#allocation6 + $0x8] sm:$0xff]
    %v46 = vmul.f32 %v42, %v42
    %v47 = vmul.f32 %v43, %v43
    %v48 = vmul.f32 %v44, %v44
    %v49 = vmul.f32 %v45, %v45
    %v50 = vadd.f32 %v46, %v48
    %v51 = vadd.f32 %v47, %v49
    %v52 = vld [vmem:[#allocation2] sm:$0x3]
    %v53 = vmul.f32 %v42, %v44
    %v54 = vmul.f32 %v43, %v45
    %v57 = vcombine.high %v53, %v53
    %v59 = vunpack.c.l.s4 1983009808
    %v60 = vunpack.c.0.s8 %v59
    %v61 = vlaneseq
    %v62 = vshrl.u32 %v61, 7
    %v63 = vsub.s32 %v60, %v62
    %v64 = vrot.slane %v53, %v63
    %v66 = vunpack.c.l.s4 1983009808
    %v67 = vunpack.c.0.s8 %v66
    %v68 = vlaneseq
    %v69 = vshrl.u32 %v68, 7
    %v70 = vsub.s32 %v67, %v69
    %v71 = vrot.slane %v57, %v70
    %v72 = vcombine.high %v64, %v64
    %v73 = vcombine.high %v71, %v71
    %v74 = vcombine.high %v54, %v54
    %v76 = vunpack.c.l.s4 1983009808
    %v77 = vunpack.c.0.s8 %v76
    %v78 = vlaneseq
    %v79 = vshrl.u32 %v78, 7
    %v80 = vsub.s32 %v77, %v79
    %v81 = vrot.slane %v54, %v80
    %v83 = vunpack.c.l.s4 1983009808
    %v84 = vunpack.c.0.s8 %v83
    %v85 = vlaneseq
    %v86 = vshrl.u32 %v85, 7
    %v87 = vsub.s32 %v84, %v86
    %v88 = vrot.slane %v74, %v87
    %v89 = vcombine.high %v81, %v81
    %v90 = vcombine.high %v88, %v88
    %vm99 = vcmask 1041408
    %v100 = vsel %vm99, %v64, 0.0
    %v101 = vsel %vm99, %v72, 0.0
    %v102 = vadd.f32 %v100, %v101
    %v103 = vsel %vm99, %v71, 0.0
    %v104 = vadd.f32 %v102, %v103
    %v105 = vsel %vm99, %v73, 0.0
    %v106 = vadd.f32 %v104, %v105
    %v107 = vsel %vm99, %v81, 0.0
    %v108 = vadd.f32 %v106, %v107
    %v109 = vsel %vm99, %v89, 0.0
    %v110 = vadd.f32 %v108, %v109
    %v111 = vsel %vm99, %v88, 0.0
    %v112 = vadd.f32 %v110, %v111
    %v113 = vsel %vm99, %v90, 0.0
    %v114 = vadd.f32 %v112, %v113
    %115 = vadd.xlane.f32.xlu0 %v114
    %v116 = vpop.xlane.xlu0 %115
    %v117 = vadd.f32 %v52, %v116
    %vm118 = vcmask 1024
    %119 = vst.msk [vmem:[#allocation2] sm:$0x3] %vm118, %v117
    %v120 = vld [vmem:[#allocation3] sm:$0x3]
    %v123 = vcombine.high %v50, %v50
    %v125 = vunpack.c.l.s4 1983009808
    %v126 = vunpack.c.0.s8 %v125
    %v127 = vlaneseq
    %v128 = vshrl.u32 %v127, 7
    %v129 = vsub.s32 %v126, %v128
    %v130 = vrot.slane %v50, %v129
    %v132 = vunpack.c.l.s4 1983009808
    %v133 = vunpack.c.0.s8 %v132
    %v134 = vlaneseq
    %v135 = vshrl.u32 %v134, 7
    %v136 = vsub.s32 %v133, %v135
    %v137 = vrot.slane %v123, %v136
    %v138 = vcombine.high %v130, %v130
    %v139 = vcombine.high %v137, %v137
    %v140 = vcombine.high %v51, %v51
    %v142 = vunpack.c.l.s4 1983009808
    %v143 = vunpack.c.0.s8 %v142
    %v144 = vlaneseq
    %v145 = vshrl.u32 %v144, 7
    %v146 = vsub.s32 %v143, %v145
    %v147 = vrot.slane %v51, %v146
    %v149 = vunpack.c.l.s4 1983009808
    %v150 = vunpack.c.0.s8 %v149
    %v151 = vlaneseq
    %v152 = vshrl.u32 %v151, 7
    %v153 = vsub.s32 %v150, %v152
    %v154 = vrot.slane %v140, %v153
    %v155 = vcombine.high %v147, %v147
    %v156 = vcombine.high %v154, %v154
    %v165 = vsel %vm99, %v130, 0.0
    %v166 = vsel %vm99, %v138, 0.0
    %v167 = vadd.f32 %v165, %v166
    %v168 = vsel %vm99, %v137, 0.0
    %v169 = vadd.f32 %v167, %v168
    %v170 = vsel %vm99, %v139, 0.0
    %v171 = vadd.f32 %v169, %v170
    %v172 = vsel %vm99, %v147, 0.0
    %v173 = vadd.f32 %v171, %v172
    %v174 = vsel %vm99, %v155, 0.0
    %v175 = vadd.f32 %v173, %v174
    %v176 = vsel %vm99, %v154, 0.0
    %v177 = vadd.f32 %v175, %v176
    %v178 = vsel %vm99, %v156, 0.0
    %v179 = vadd.f32 %v177, %v178
    %180 = vadd.xlane.f32.xlu0 %v179
    %v181 = vpop.xlane.xlu0 %180
    %v182 = vadd.f32 %v120, %v181
    %183 = vst.msk [vmem:[#allocation3] sm:$0x3] %vm118, %v182
    // Predicated region
    $region22: #{tpu_custom_call.1} parent=1 // pred_check
      %p184 = pneg %p35
    $region23: #{tpu_custom_call.1} parent=1 // pred_check_branch
      %186 = sbr.rel (%p184) target = $region25
    $region24: #{tpu_custom_call.1} parent=1 // pred_region
      %v187 = vld [vmem:[#allocation2] sm:$0x3]
      %v188 = vadd.f32 %v187, 1.0
      %v189 = vld [vmem:[#allocation3] sm:$0x3]
      %v190 = vadd.f32 %v189, 1.0
      %v191 = vrcp.pop %v190
      %v192 = vmul.f32 %v188, %v191
      %v193 = vsub.f32 1.0, %v192
      %194 = vst.msk [vmem:[%s2] sm:$0x3] %vm118, %v193
    $region25: #{tpu_custom_call.1} parent=1 // pred_fallthru
      _
    // Predicated region
    $region26: #{tpu_custom_call.1} parent=1 // pred_check
      _
    $region27: #{tpu_custom_call.1} parent=1 // pred_check_branch
      %196 = sbr.rel (0) target = $region29
    $region28: #{tpu_custom_call.1} parent=1 // pred_region
      _
    $region29: #{tpu_custom_call.1} parent=1 // pred_fallthru
      _
    // Predicated region
    $region30: #{tpu_custom_call.1} parent=1 // pred_check
      _
    $region31: #{tpu_custom_call.1} parent=1 // pred_check_branch
      %198 = sbr.rel (0) target = $region33
    $region32: #{tpu_custom_call.1} parent=1 // pred_region
      _
    $region33: #{tpu_custom_call.1} parent=1 // pred_fallthru
      _
    %199 = vsyncpa [#allocation5], 1
    %200 = vsyncpa [#allocation7], 1

</llo_original>
